<compile_context>
chip_gen: v7x
topology: tpu7x:2x2x1
jax: 0.10.0
libtpu: 0.0.40
codegen_flags: <defaults>
</compile_context>

<pallas_src>
import functools

import jax
import jax.numpy as jnp
from jax import lax
from jax.experimental import pallas as pl
from jax.experimental.pallas import tpu as pltpu

LANE = 128          # TPU lane width
BM_CAP = 4096       # batch-tile cap (multiple of 16); ~2.6 MiB VMEM at this size
NEG_BIG = -1e30     # large finite negative for masking padded logit lanes


def policy_kernel(x_ref, w1t_ref, w2t_ref, o_ref, *, n_actions):
    # x_ref:   (bm, S)      bf16 input tile (pre-cast outside the kernel)
    # w1t_ref: (S, H)       bf16 first-layer weight, (in, out) layout, resident
    # w2t_ref: (H, A_pad)   bf16 second-layer weight, zero-padded to 128 lanes
    # o_ref:   (bm, A_pad)  bf16 softmax probabilities (lane-dense store)
    h = jnp.dot(x_ref[...], w1t_ref[...],
                preferred_element_type=jnp.float32)            # MXU, f32 acc
    # Dropout(p=0.6) -> identity at inference.
    h = jnp.maximum(h, 0.0)                                    # ReLU (VPU)
    logits = jnp.dot(h.astype(jnp.bfloat16), w2t_ref[...],
                     preferred_element_type=jnp.float32)       # MXU, f32 acc
    # Mask padded lanes so they contribute exp(very_negative)=0 to the softmax.
    lane_idx = lax.broadcasted_iota(jnp.int32, logits.shape, 1)
    logits = jnp.where(lane_idx < n_actions, logits, NEG_BIG)
    # Numerically stable softmax along the lane dim (f32 internally).
    m = jnp.max(logits, axis=-1, keepdims=True)
    e = jnp.exp(logits - m)                                    # EUP
    denom = jnp.sum(e, axis=-1, keepdims=True)                 # XLU
    inv = pl.reciprocal(denom)                                 # exact reciprocal
    o_ref[...] = (e * inv).astype(o_ref.dtype)


@functools.lru_cache(maxsize=None)
def _num_tensorcores():
    """TensorCores per chip: 2 on v7x, 1 on v5e/v6e. Conservative default 1."""
    try:
        info = pltpu.get_tpu_info()
        for attr in ("num_cores", "core_count", "num_tensorcores",
                     "tensorcore_count", "cores_per_chip"):
            n = getattr(info, attr, None)
            if isinstance(n, int) and 1 <= n <= 8:
                return n
    except Exception:
        pass
    try:
        kind = jax.devices()[0].device_kind.lower()
        if "v7" in kind or "7x" in kind:
            return 2
    except Exception:
        pass
    return 1


def _choose_bm(batch, n_cores):
    """Batch tile size.

    Single-TC chips (v5e/v6e): one tile covering the whole batch (up to BM_CAP)
    -- grid steps are a serial loop there, so splitting only adds ~0.35us/step.
    v7x (2 TCs): split into >=2 'parallel' steps only when batch >= 1024 so
    each core's work amortizes its own step cost and weight DMA.
    """
    want_split = (n_cores >= 2 and batch >= 1024)
    if batch <= BM_CAP and not want_split:
        return batch                                  # single tile, no padding
    min_steps = 2 if want_split else 1
    steps = max(min_steps, pl.cdiv(batch, BM_CAP))
    return min(BM_CAP, 16 * pl.cdiv(pl.cdiv(batch, steps), 16))


def prepare_params(w1, w2):
    """One-time prep of PyTorch-Linear-layout weights.

    w1: (H, S), w2: (A, H)  ->  bf16 (S, H) and zero-padded bf16 (H, A_pad).
    Done once so no transpose/pad/cast runs on the per-call path.
    """
    H, S = w1.shape
    A, H2 = w2.shape
    assert H2 == H
    a_pad = max(LANE, pl.cdiv(A, LANE) * LANE)
    w1t = jnp.asarray(w1, jnp.bfloat16).T                     # (S, H)
    w2t_pad = jnp.zeros((H, a_pad), jnp.bfloat16)
    w2t_pad = w2t_pad.at[:, :A].set(jnp.asarray(w2, jnp.bfloat16).T)
    return w1t, w2t_pad, A


@functools.partial(jax.jit, static_argnames=("n_actions", "n_cores"))
def policy_forward(x, w1t, w2t_pad, n_actions, n_cores=1):
    """x: (B, S); w1t: (S, H) bf16; w2t_pad: (H, A_pad) bf16.

    Returns a lane-dense (B, A_pad) bf16 slab of probabilities; lanes
    [n_actions:] are exactly 0 (index lazily downstream -- no strided copy).
    """
    B, S = x.shape
    S2, H = w1t.shape
    assert S2 == S
    _, A_pad = w2t_pad.shape

    x = x.astype(jnp.bfloat16)          # pre-cast: halves x DMA, MXU eats bf16

    bm = _choose_bm(B, n_cores)
    B_pad = pl.cdiv(B, bm) * bm
    if B_pad != B:
        x = jnp.pad(x, ((0, B_pad - B), (0, 0)))      # zero rows, sliced away
    grid = (B_pad // bm,)

    cost = pl.CostEstimate(
        flops=2 * B_pad * (S * H + H * A_pad),
        transcendentals=B_pad * A_pad,
        bytes_accessed=(B_pad * S * 2) + (S * H * 2) + (H * A_pad * 2)
                       + (B_pad * A_pad * 2),
    )

    out = pl.pallas_call(
        functools.partial(policy_kernel, n_actions=n_actions),
        out_shape=jax.ShapeDtypeStruct((B_pad, A_pad), jnp.bfloat16),
        grid_spec=pltpu.PrefetchScalarGridSpec(
            num_scalar_prefetch=0,
            grid=grid,
            in_specs=[
                pl.BlockSpec((bm, S), lambda i: (i, 0)),       # x tile
                pl.BlockSpec((S, H), lambda i: (0, 0)),        # W1^T (resident)
                pl.BlockSpec((H, A_pad), lambda i: (0, 0)),    # W2^T padded (resident)
            ],
            out_specs=pl.BlockSpec((bm, A_pad), lambda i: (i, 0)),
        ),
        compiler_params=pltpu.CompilerParams(
            dimension_semantics=("parallel",),
        ),
        cost_estimate=cost,
    )(x, w1t, w2t_pad)

    if B_pad != B:
        out = out[:B]                   # row slice only; lane slab kept dense
    return out


if __name__ == "__main__":
    # Small shapes consistent with the module: state_space=32, hidden=128,
    # action_space=8, batch=8.
    B, S, H, A = 8, 32, 128, 8

    key = jax.random.PRNGKey(0)
    kx, k1, k2 = jax.random.split(key, 3)

    x = jax.random.normal(kx, (B, S), dtype=jnp.float32)
    # Deterministic "Kaiming-ish" init for the two bias-free Linear layers
    # (PyTorch Linear weight layout: (out_features, in_features)).
    w1 = jax.random.normal(k1, (H, S), dtype=jnp.float32) * (1.0 / jnp.sqrt(S))
    w2 = jax.random.normal(k2, (A, H), dtype=jnp.float32) * (1.0 / jnp.sqrt(H))

    # One-time parameter prep (transpose + lane pad + bf16), then fused forward.
    w1t, w2t_pad, n_actions = prepare_params(w1, w2)
    n_cores = _num_tensorcores()

    probs_pad = policy_forward(x, w1t, w2t_pad, n_actions, n_cores=n_cores)
    probs_pad = jax.block_until_ready(probs_pad)

    assert probs_pad.shape == (B, LANE)
    # Padded lanes must be exactly zero (mask -> exp underflows to 0).
    assert jnp.all(probs_pad[:, n_actions:] == 0)

    probs = probs_pad[:, :n_actions].astype(jnp.float32)

    # Reference in plain f32 JAX (kernel uses bf16 MXU operands + bf16 output,
    # so compare with tolerances that cover that quantization).
    ref = jax.nn.softmax(jnp.maximum(x @ w1.T, 0.0) @ w2.T, axis=-1)
    assert probs.shape == (B, A)
    assert jnp.all(jnp.isfinite(probs))
    assert jnp.allclose(probs, ref, atol=5e-2, rtol=5e-2)
    assert jnp.allclose(jnp.sum(probs, axis=-1), 1.0, atol=1e-2)

    print("KERNEL_OK")
</pallas_src>

<mosaic_0001>
module attributes {stable_mosaic.version = 11 : i64} {
  func.func @policy_kernel(%arg0: i32, %arg1: memref<8x32xbf16, #tpu.memory_space<vmem>>, %arg2: memref<32x128xbf16, #tpu.memory_space<vmem>>, %arg3: memref<128x128xbf16, #tpu.memory_space<vmem>>, %arg4: memref<8x128xbf16, #tpu.memory_space<vmem>>) attributes {dimension_semantics = [#tpu.dimension_semantics<parallel>], iteration_bounds = array<i64: 1>, scalar_prefetch = 0 : i64, scratch_operands = 0 : i64, tpu.core_type = #tpu.core_type<tc>, window_params = [{transform_indices = @transform_0, window_bounds = array<i64: 8, 32>}, {pipeline_mode = #tpu.pipeline_mode<synchronous>, transform_indices = @transform_1, window_bounds = array<i64: 32, 128>}, {pipeline_mode = #tpu.pipeline_mode<synchronous>, transform_indices = @transform_2, window_bounds = array<i64: 128, 128>}, {transform_indices = @transform_3, window_bounds = array<i64: 8, 128>}]} {
    %c0 = arith.constant 0 : index
    %c0_0 = arith.constant 0 : index
    %0 = vector.load %arg1[%c0, %c0_0] : memref<8x32xbf16, #tpu.memory_space<vmem>>, vector<8x32xbf16>
    %c0_1 = arith.constant 0 : index
    %c0_2 = arith.constant 0 : index
    %1 = vector.load %arg2[%c0_1, %c0_2] : memref<32x128xbf16, #tpu.memory_space<vmem>>, vector<32x128xbf16>
    %cst = arith.constant dense<0.000000e+00> : vector<8x128xf32>
    %2 = tpu.matmul %0, %1, %cst {dimension_numbers = #tpu.dot_dimension_numbers<[1], [0], [0], [1], [0, 0, 1, 1], [], []>} : vector<8x32xbf16>, vector<32x128xbf16>, vector<8x128xf32> -> vector<8x128xf32>
    %cst_3 = arith.constant 0.000000e+00 : f32
    %3 = vector.broadcast %cst_3 : f32 to vector<8x128xf32>
    %4 = arith.maximumf %2, %3 : vector<8x128xf32>
    %5 = arith.truncf %4 : vector<8x128xf32> to vector<8x128xbf16>
    %c0_4 = arith.constant 0 : index
    %c0_5 = arith.constant 0 : index
    %6 = vector.load %arg3[%c0_4, %c0_5] : memref<128x128xbf16, #tpu.memory_space<vmem>>, vector<128x128xbf16>
    %cst_6 = arith.constant dense<0.000000e+00> : vector<8x128xf32>
    %7 = tpu.matmul %5, %6, %cst_6 {dimension_numbers = #tpu.dot_dimension_numbers<[1], [0], [0], [1], [0, 0, 1, 1], [], []>} : vector<8x128xbf16>, vector<128x128xbf16>, vector<8x128xf32> -> vector<8x128xf32>
    %8 = tpu.iota {dimensions = array<i32: 1>} : vector<8x128xi32>
    %c8_i32 = arith.constant 8 : i32
    %9 = vector.broadcast %c8_i32 : i32 to vector<8x128xi32>
    %10 = arith.cmpi slt, %8, %9 : vector<8x128xi32>
    %cst_7 = arith.constant -1.000000e+30 : f32
    %11 = vector.broadcast %cst_7 : f32 to vector<8x128xf32>
    %12 = arith.select %10, %7, %11 : vector<8x128xi1>, vector<8x128xf32>
    %cst_8 = arith.constant dense<0xFF800000> : vector<8xf32>
    %13 = vector.multi_reduction <maximumf>, %12, %cst_8 [1] : vector<8x128xf32> to vector<8xf32>
    %14 = vector.shape_cast %13 : vector<8xf32> to vector<8x1xf32>
    %15 = vector.broadcast %14 : vector<8x1xf32> to vector<8x128xf32>
    %16 = arith.subf %12, %15 : vector<8x128xf32>
    %17 = math.exp %16 : vector<8x128xf32>
    %cst_9 = arith.constant dense<0.000000e+00> : vector<8xf32>
    %18 = vector.multi_reduction <add>, %17, %cst_9 [1] : vector<8x128xf32> to vector<8xf32>
    %19 = vector.shape_cast %18 : vector<8xf32> to vector<8x1xf32>
    %20 = tpu.reciprocal %19 : vector<8x1xf32> -> vector<8x1xf32>
    %21 = vector.broadcast %20 : vector<8x1xf32> to vector<8x128xf32>
    %22 = arith.mulf %17, %21 : vector<8x128xf32>
    %23 = arith.truncf %22 : vector<8x128xf32> to vector<8x128xbf16>
    %c0_10 = arith.constant 0 : index
    %c0_11 = arith.constant 0 : index
    %24 = vector.load %arg4[%c0_10, %c0_11] : memref<8x128xbf16, #tpu.memory_space<vmem>>, vector<8x128xbf16>
    tpu.vector_store %arg4[%c0_10, %c0_11], %23 {strides = array<i32>} : memref<8x128xbf16, #tpu.memory_space<vmem>>, vector<8x128xbf16>,
    return
  }
  func.func @transform_0(%arg0: i32) -> (i32, i32) {
    %c0_i32 = arith.constant 0 : i32
    %c0_i32_0 = arith.constant 0 : i32
    return %arg0, %c0_i32 : i32, i32
  }
  func.func @transform_1(%arg0: i32) -> (i32, i32) {
    %c0_i32 = arith.constant 0 : i32
    %c0_i32_0 = arith.constant 0 : i32
    %c0_i32_1 = arith.constant 0 : i32
    return %c0_i32, %c0_i32_0 : i32, i32
  }
  func.func @transform_2(%arg0: i32) -> (i32, i32) {
    %c0_i32 = arith.constant 0 : i32
    %c0_i32_0 = arith.constant 0 : i32
    %c0_i32_1 = arith.constant 0 : i32
    return %c0_i32, %c0_i32_0 : i32, i32
  }
  func.func @transform_3(%arg0: i32) -> (i32, i32) {
    %c0_i32 = arith.constant 0 : i32
    %c0_i32_0 = arith.constant 0 : i32
    return %arg0, %c0_i32 : i32, i32
  }
}

</mosaic_0001>

<llo_original>
// kernel: policy_forward.1
$region0: #{policy_forward.1}
  #allocation0 [shape = 'u32[]', space=smem, size = 0x4, offset = 0x4, fixed_abs, tag = 'smem constant byte address 0x4 - core index']
  #allocation1 [shape = 'u32[144,128]{1,0:T(1,128)}', space=vmem, size = 0x12000, scoped, tag = 'internal scratch']
  %s0 = inlined_call_operand.vmem [shape: bf16[8,32], index: 0, kind: input, shape index: {}]
  %s1 = inlined_call_operand.hbm [shape: bf16[32,128], index: 1, kind: input, shape index: {}]
  %s2 = inlined_call_operand.hbm [shape: bf16[128,128], index: 2, kind: input, shape index: {}]
  %s3 = inlined_call_operand.hbm [shape: bf16[8,128], index: 3, kind: output, shape index: {}]
  %s4 = sld [smem:[#allocation0]]
  $region30: #{policy_forward.1} parent=0
    _
  %s6 = ssub.s32 1, %s4
  %s7 = scalar_select 0, %s6, %s4
  $region1: #{policy_forward.1} parent=0
    #allocation2 [shape = 'u8[8192]{0}', space=vmem, size = 0x2000, scoped, tag = 'input window, operand 1, single buffered']
    #allocation3 [shape = 's32[1]{0}', space=sflag, size = 0x4, scoped, tag = 'scoped memory for policy_forward.1']
    #allocation4 [shape = 's32[1]{0}', space=sflag, size = 0x4, scoped, tag = 'scoped memory for policy_forward.1']
    #allocation5 [shape = 'u8[32768]{0}', space=vmem, size = 0x8000, scoped, tag = 'input window, operand 2, single buffered']
    #allocation6 [shape = 's32[1]{0}', space=sflag, size = 0x4, scoped, tag = 'scoped memory for policy_forward.1']
    #allocation7 [shape = 'u8[2048]{0}', space=vmem, size = 0x800, scoped, tag = 'output window, operand 0, single buffered']
    %8 = vsyncpa [#allocation3], 0
    %9 = vsyncpa [#allocation6], 0
    %10 = vsyncpa [#allocation4], 0
    // Predicated region
    $region2: #{policy_forward.1} parent=1 // pred_check
      _
    $region3: #{policy_forward.1} parent=1 // pred_check_branch
      %12 = sbr.rel (0) target = $region5
    $region4: #{policy_forward.1} parent=1 // pred_region
      _
    $region5: #{policy_forward.1} parent=1 // pred_fallthru
      _
    // Predicated region
    $region6: #{policy_forward.1} parent=1 // pred_check
      _
    $region7: #{policy_forward.1} parent=1 // pred_check_branch
      %14 = sbr.rel (0) target = $region9
    $region8: #{policy_forward.1} parent=1 // pred_region
      %s16 = ssub.s32 256, 256
      %17 = vsyncadd [#allocation3], %s16
      %s18 = sshll.u32 [#allocation2], 4
      %s19 = int_to_ptr.vmem [resolvable:$true] %s18
      %24 = dma.hbm_to_vmem [thread:$0]  %s1, 256, %s19, [#allocation3], 64, 64, 4
    $region9: #{policy_forward.1} parent=1 // pred_fallthru
      _
    // Predicated region
    $region10: #{policy_forward.1} parent=1 // pred_check
      _
    $region11: #{policy_forward.1} parent=1 // pred_check_branch
      %26 = sbr.rel (0) target = $region13
    $region12: #{policy_forward.1} parent=1 // pred_region
      %s28 = ssub.s32 1024, 1024
      %29 = vsyncadd [#allocation6], %s28
      %s30 = sshll.u32 [#allocation5], 4
      %s31 = int_to_ptr.vmem [resolvable:$true] %s30
      %36 = dma.hbm_to_vmem [thread:$0]  %s2, 1024, %s31, [#allocation6], 64, 64, 4
    $region13: #{policy_forward.1} parent=1 // pred_fallthru
      _
    // Predicated region
    $region14: #{policy_forward.1} parent=1 // pred_check
      _
    $region15: #{policy_forward.1} parent=1 // pred_check_branch
      %38 = sbr.rel (0) target = $region17
    $region16: #{policy_forward.1} parent=1 // pred_region
      %39 = dma.done [#allocation3], 256
    $region17: #{policy_forward.1} parent=1 // pred_fallthru
      _
    // Predicated region
    $region18: #{policy_forward.1} parent=1 // pred_check
      _
    $region19: #{policy_forward.1} parent=1 // pred_check_branch
      %41 = sbr.rel (0) target = $region21
    $region20: #{policy_forward.1} parent=1 // pred_region
      %42 = dma.done [#allocation6], 1024
    $region21: #{policy_forward.1} parent=1 // pred_fallthru
      _
    %v44 = vld [vmem:[%s0] sm:$0xf]
    %v45 = vld [vmem:[#allocation2] sm:$0xf]
    %v46 = vld [vmem:[#allocation2 + $0x4] sm:$0xf]
    %v47 = vld [vmem:[#allocation2 + $0x8] sm:$0xf]
    %v48 = vld [vmem:[#allocation2 + $0xc] sm:$0xf]
    %v53 = vunpack.c.l.b16 %v45
    %v54 = vunpack.c.l.b16 %v46
    %v55 = vunpack.c.l.b16 %v47
    %v56 = vunpack.c.l.b16 %v48
    %v57 = vpack.c.b16 %v54, %v53
    %v58 = vpack.c.b16 %v56, %v55
    %vm61 = vcmask 261120
    %v63 = vsel %vm61, %v44, 0
    %65 = vmatprep.subr.bf16.mxu0 0
    %66 = vmatpush1.bf16.msra.mxu0 %v57
    %67 = vmatprep.subr.bf16.mxu0 0
    %68 = vmatpush1.bf16.msra.mxu0 %v58
    %69 = vmatprep.subr.bf16.mxu0 0
    %70 = vmatpush1.bf16.msra.mxu0 0
    %71 = vmatprep.subr.bf16.mxu0 0
    %72 = vmatpush1.bf16.msra.mxu0 0
    %73 = vmatprep.subr.bf16.mxu0 0
    %74 = vmatpush1.bf16.msra.mxu0 0
    %75 = vmatprep.subr.bf16.mxu0 0
    %76 = vmatpush1.bf16.msra.mxu0 0
    %77 = vmatprep.subr.bf16.mxu0 0
    %78 = vmatpush1.bf16.msra.mxu0 0
    %79 = vmatprep.subr.bf16.mxu0 0
    %80 = vmatpush1.bf16.msra.mxu0 0
    %81 = vmatprep.subr.bf16.mxu0 0
    %82 = vmatpush1.bf16.msra.mxu0 0
    %83 = vmatprep.subr.bf16.mxu0 0
    %84 = vmatpush1.bf16.msra.mxu0 0
    %85 = vmatprep.subr.bf16.mxu0 0
    %86 = vmatpush1.bf16.msra.mxu0 0
    %87 = vmatprep.subr.bf16.mxu0 0
    %88 = vmatpush1.bf16.msra.mxu0 0
    %89 = vmatprep.subr.bf16.mxu0 0
    %90 = vmatpush1.bf16.msra.mxu0 0
    %91 = vmatprep.subr.bf16.mxu0 0
    %92 = vmatpush1.bf16.msra.mxu0 0
    %93 = vmatprep.subr.bf16.mxu0 0
    %94 = vmatpush1.bf16.msra.mxu0 0
    %95 = vmatprep.subr.bf16.mxu0 0
    %96 = vmatpush1.bf16.msra.mxu0 0
    %97 = vmatprep.mubr.bf16.mxu0 0
    %98 = vmatmul.mubr.bf16.gmra.mrb[0].mxu0 %v63
    %v99 = vpop.f32.mrb[0].mxu0
    %v100 = vadd.f32 0.0, %v99
    %v101 = vpop.f32.mrb[0].mxu0
    %v102 = vpop.f32.mrb[0].mxu0
    %v103 = vpop.f32.mrb[0].mxu0
    %104 = vdwg.mxu0
    %v105 = vmax.f32 %v100, 0.0
    %v106 = vpack.c.bf16 %v105, %v105
    %v107 = vld [vmem:[#allocation5] sm:$0xf]
    %v108 = vld [vmem:[#allocation5 + $0x4] sm:$0xf]
    %v109 = vld [vmem:[#allocation5 + $0x8] sm:$0xf]
    %v110 = vld [vmem:[#allocation5 + $0xc] sm:$0xf]
    %v111 = vld [vmem:[#allocation5 + $0x10] sm:$0xf]
    %v112 = vld [vmem:[#allocation5 + $0x14] sm:$0xf]
    %v113 = vld [vmem:[#allocation5 + $0x18] sm:$0xf]
    %v114 = vld [vmem:[#allocation5 + $0x1c] sm:$0xf]
    %v115 = vld [vmem:[#allocation5 + $0x20] sm:$0xf]
    %v116 = vld [vmem:[#allocation5 + $0x24] sm:$0xf]
    %v117 = vld [vmem:[#allocation5 + $0x28] sm:$0xf]
    %v118 = vld [vmem:[#allocation5 + $0x2c] sm:$0xf]
    %v119 = vld [vmem:[#allocation5 + $0x30] sm:$0xf]
    %v120 = vld [vmem:[#allocation5 + $0x34] sm:$0xf]
    %v121 = vld [vmem:[#allocation5 + $0x38] sm:$0xf]
    %v122 = vld [vmem:[#allocation5 + $0x3c] sm:$0xf]
    %v139 = vunpack.c.l.b16 %v107
    %v140 = vunpack.c.l.b16 %v108
    %v141 = vunpack.c.l.b16 %v109
    %v142 = vunpack.c.l.b16 %v110
    %v143 = vunpack.c.l.b16 %v111
    %v144 = vunpack.c.l.b16 %v112
    %v145 = vunpack.c.l.b16 %v113
    %v146 = vunpack.c.l.b16 %v114
    %v147 = vunpack.c.l.b16 %v115
    %v148 = vunpack.c.l.b16 %v116
    %v149 = vunpack.c.l.b16 %v117
    %v150 = vunpack.c.l.b16 %v118
    %v151 = vunpack.c.l.b16 %v119
    %v152 = vunpack.c.l.b16 %v120
    %v153 = vunpack.c.l.b16 %v121
    %v154 = vunpack.c.l.b16 %v122
    %v155 = vpack.c.b16 %v140, %v139
    %v156 = vpack.c.b16 %v142, %v141
    %v157 = vpack.c.b16 %v144, %v143
    %v158 = vpack.c.b16 %v146, %v145
    %v159 = vpack.c.b16 %v148, %v147
    %v160 = vpack.c.b16 %v150, %v149
    %v161 = vpack.c.b16 %v152, %v151
    %v162 = vpack.c.b16 %v154, %v153
    %171 = vmatprep.subr.bf16.mxu0 0
    %172 = vmatpush1.bf16.msra.mxu0 %v155
    %173 = vmatprep.subr.bf16.mxu0 0
    %174 = vmatpush1.bf16.msra.mxu0 %v156
    %175 = vmatprep.subr.bf16.mxu0 0
    %176 = vmatpush1.bf16.msra.mxu0 %v157
    %177 = vmatprep.subr.bf16.mxu0 0
    %178 = vmatpush1.bf16.msra.mxu0 %v158
    %179 = vmatprep.subr.bf16.mxu0 0
    %180 = vmatpush1.bf16.msra.mxu0 %v159
    %181 = vmatprep.subr.bf16.mxu0 0
    %182 = vmatpush1.bf16.msra.mxu0 %v160
    %183 = vmatprep.subr.bf16.mxu0 0
    %184 = vmatpush1.bf16.msra.mxu0 %v161
    %185 = vmatprep.subr.bf16.mxu0 0
    %186 = vmatpush1.bf16.msra.mxu0 %v162
    %187 = vmatprep.subr.bf16.mxu0 0
    %188 = vmatpush1.bf16.msra.mxu0 0
    %189 = vmatprep.subr.bf16.mxu0 0
    %190 = vmatpush1.bf16.msra.mxu0 0
    %191 = vmatprep.subr.bf16.mxu0 0
    %192 = vmatpush1.bf16.msra.mxu0 0
    %193 = vmatprep.subr.bf16.mxu0 0
    %194 = vmatpush1.bf16.msra.mxu0 0
    %195 = vmatprep.subr.bf16.mxu0 0
    %196 = vmatpush1.bf16.msra.mxu0 0
    %197 = vmatprep.subr.bf16.mxu0 0
    %198 = vmatpush1.bf16.msra.mxu0 0
    %199 = vmatprep.subr.bf16.mxu0 0
    %200 = vmatpush1.bf16.msra.mxu0 0
    %201 = vmatprep.subr.bf16.mxu0 0
    %202 = vmatpush1.bf16.msra.mxu0 0
    %203 = vmatprep.mubr.bf16.mxu0 0
    %204 = vmatmul.mubr.bf16.gmra.mrb[0].mxu0 %v106
    %v205 = vpop.f32.mrb[0].mxu0
    %v206 = vadd.f32 0.0, %v205
    %v207 = vpop.f32.mrb[0].mxu0
    %v208 = vpop.f32.mrb[0].mxu0
    %v209 = vpop.f32.mrb[0].mxu0
    %210 = vdwg.mxu0
    %v211 = vlaneseq
    %v212 = vand.u32 %v211, 127
    %vm213 = vcmp.lt.s32.totalorder %v212, 8
    %v214 = vsel %vm213, %v206, -1e+30
    %215 = vmax.xlane.f32.xlu0 %v214
    %v216 = vpop.xlane.xlu0 %215
    %v217 = vsub.f32 %v214, %v216
    %v218 = vmul.f32 %v217, 1.442695
    %v219 = vpow.pop %v218
    %220 = vadd.xlane.f32.xlu0 %v219
    %v221 = vpop.xlane.xlu0 %220
    %v222 = vrcp.pop %v221
    %v223 = vmul.f32 %v219, %v222
    %v224 = vpack.c.bf16 %v223, %v223
    %225 = vst [vmem:[#allocation7] sm:$0xf] %v224
    // Predicated region
    $region22: #{policy_forward.1} parent=1 // pred_check
      _
    $region23: #{policy_forward.1} parent=1 // pred_check_branch
      %227 = sbr.rel (0) target = $region25
    $region24: #{policy_forward.1} parent=1 // pred_region
      %s229 = ssub.s32 64, 64
      %230 = vsyncadd [#allocation4], %s229
      %s232 = sshll.u32 [#allocation7], 4
      %s233 = int_to_ptr.vmem [resolvable:$true] %s232
      %235 = dma.vmem_to_hbm [thread:$0]  %s233, 64, %s3, [#allocation4]
    $region25: #{policy_forward.1} parent=1 // pred_fallthru
      _
    // Predicated region
    $region26: #{policy_forward.1} parent=1 // pred_check
      _
    $region27: #{policy_forward.1} parent=1 // pred_check_branch
      %237 = sbr.rel (0) target = $region29
    $region28: #{policy_forward.1} parent=1 // pred_region
      %238 = dma.done [#allocation4], 64
    $region29: #{policy_forward.1} parent=1 // pred_fallthru
      _
    %239 = vsyncpa [#allocation3], 1
    %240 = vsyncpa [#allocation6], 1
    %241 = vsyncpa [#allocation4], 1

</llo_original>
